<compile_context>
chip_gen: v7x
topology: tpu7x:2x2x1
jax: 0.10.0
libtpu: 0.0.40
codegen_flags: <defaults>
</compile_context>

<pallas_src>
import math

import jax
import jax.numpy as jnp
from jax.experimental import pallas as pl
from jax.experimental.pallas import tpu as pltpu


def _round_up(x, m):
    return ((x + m - 1) // m) * m


def _diayn_kernel(raw_ref, w1_ref, z_ref, b1_ref,
                  w2x_ref, w2z_ref, b2_ref,
                  w3_ref, b3_ref,
                  o_ref, acc_ref):
    """Grid = (batch_tiles, k_tiles).  K (flattened-obs reduction) is the last axis."""
    k = pl.program_id(1)

    @pl.when(k == 0)
    def _():
        acc_ref[...] = jnp.zeros_like(acc_ref)

    # Steady state: one bf16 matmul-accumulate per (TM, TK) raw tile, f32 accumulator.
    acc_ref[...] += jnp.dot(raw_ref[...], w1_ref[...],
                            preferred_element_type=jnp.float32)

    # Epilogue only on the final K step: bias + ReLU, then the two tiny resident-weight
    # matmuls, and exactly one (TM, F) store per batch tile.
    @pl.when(k == pl.num_programs(1) - 1)
    def _():
        h1 = jnp.maximum(acc_ref[...] + b1_ref[...], 0.0)          # f32 elementwise
        h2 = (jnp.dot(h1.astype(w2x_ref.dtype), w2x_ref[...],
                      preferred_element_type=jnp.float32)
              + jnp.dot(z_ref[...], w2z_ref[...],
                        preferred_element_type=jnp.float32)
              + b2_ref[...])
        h2 = jnp.maximum(h2, 0.0)
        h3 = jnp.dot(h2.astype(w3_ref.dtype), w3_ref[...],
                     preferred_element_type=jnp.float32) + b3_ref[...]
        o_ref[...] = jnp.maximum(h3, 0.0).astype(o_ref.dtype)


def diayn_flatten_forward(raw_nchw, z_onehot, params, *,
                          tm=256, tk=1024, compute_dtype=jnp.bfloat16):
    """raw_nchw: (B, C, H, W) float32; z_onehot: (B, number_z) float32 -> (B, features_dim) f32."""
    B = raw_nchw.shape[0]
    n_flatten = int(math.prod(raw_nchw.shape[1:]))
    raw_flat = raw_nchw.reshape(B, n_flatten)          # row-major flatten == torch NCHW view

    w1, b1 = params["w1"], params["b1"]
    w2, b2 = params["w2"], params["b2"]
    w3, b3 = params["w3"], params["b3"]
    F = w1.shape[1]
    Hh = w2.shape[1]
    Z = z_onehot.shape[1]
    w2x, w2z = w2[:F, :], w2[F:, :]                    # split-weight concat

    # ---- batch (M) tiling ----
    if B <= tm:
        tm_eff, Bp = B, B                              # full-dim block: no (8, .) constraint
    else:
        tm_eff = _round_up(tm, 8)
        Bp = _round_up(B, tm_eff)

    # ---- flattened-obs (K) tiling ----
    if n_flatten <= tk:
        tk_eff = _round_up(n_flatten, 128)
        Kp = tk_eff
    else:
        tk_eff = _round_up(tk, 128)
        Kp = _round_up(n_flatten, tk_eff)

    # Zero-padding is exact for the matmul; padded batch rows are sliced off at the end.
    if Bp != B or Kp != n_flatten:
        raw_flat = jnp.pad(raw_flat, ((0, Bp - B), (0, Kp - n_flatten)))
    z_p = jnp.pad(z_onehot, ((0, Bp - B), (0, 0))) if Bp != B else z_onehot
    w1_p = jnp.pad(w1, ((0, Kp - n_flatten), (0, 0))) if Kp != n_flatten else w1

    # bf16 operands for HBM bandwidth + native MXU path; f32 accumulation in-kernel.
    cd = compute_dtype
    raw_c, w1_c = raw_flat.astype(cd), w1_p.astype(cd)
    z_c, w2x_c, w2z_c, w3_c = z_p.astype(cd), w2x.astype(cd), w2z.astype(cd), w3.astype(cd)
    b1_c = b1.reshape(1, -1).astype(jnp.float32)
    b2_c = b2.reshape(1, -1).astype(jnp.float32)
    b3_c = b3.reshape(1, -1).astype(jnp.float32)

    grid = (Bp // tm_eff, Kp // tk_eff)

    grid_spec = pltpu.PrefetchScalarGridSpec(
        num_scalar_prefetch=0,
        grid=grid,
        in_specs=[
            pl.BlockSpec((tm_eff, tk_eff), lambda i, k: (i, k)),   # raw tile (streamed)
            pl.BlockSpec((tk_eff, F),      lambda i, k: (k, 0)),   # W1 tile (streamed)
            pl.BlockSpec((tm_eff, Z),      lambda i, k: (i, 0)),   # z_onehot (per batch tile)
            pl.BlockSpec((1, F),           lambda i, k: (0, 0)),   # b1   (resident)
            pl.BlockSpec((F, Hh),          lambda i, k: (0, 0)),   # W2_x (resident)
            pl.BlockSpec((Z, Hh),          lambda i, k: (0, 0)),   # W2_z (resident)
            pl.BlockSpec((1, Hh),          lambda i, k: (0, 0)),   # b2   (resident)
            pl.BlockSpec((Hh, F),          lambda i, k: (0, 0)),   # W3   (resident)
            pl.BlockSpec((1, F),           lambda i, k: (0, 0)),   # b3   (resident)
        ],
        out_specs=pl.BlockSpec((tm_eff, F), lambda i, k: (i, 0)),  # written once per batch tile
        scratch_shapes=[pltpu.VMEM((tm_eff, F), jnp.float32)],     # h1 accumulator
    )

    out_padded = pl.pallas_call(
        _diayn_kernel,
        out_shape=jax.ShapeDtypeStruct((Bp, F), jnp.float32),
        grid_spec=grid_spec,
        compiler_params=pltpu.CompilerParams(
            dimension_semantics=("parallel", "arbitrary"),   # batch parallel (v7x megacore)
        ),
    )(raw_c, w1_c, z_c, b1_c, w2x_c, w2z_c, b2_c, w3_c, b3_c)

    return out_padded[:B]


def init_params(key, n_flatten, features_dim=32, number_z=50, hidden=32):
    """Deterministic PyTorch-style uniform(-1/sqrt(fan_in), 1/sqrt(fan_in)) init."""
    ks = jax.random.split(key, 6)

    def lin(kw, kb, fan_in, fan_out):
        bound = 1.0 / jnp.sqrt(jnp.float32(fan_in))
        w = jax.random.uniform(kw, (fan_in, fan_out), jnp.float32, -bound, bound)
        b = jax.random.uniform(kb, (fan_out,), jnp.float32, -bound, bound)
        return w, b

    w1, b1 = lin(ks[0], ks[1], n_flatten, features_dim)
    w2, b2 = lin(ks[2], ks[3], features_dim + number_z, hidden)
    w3, b3 = lin(ks[4], ks[5], hidden, features_dim)
    return {"w1": w1, "b1": b1, "w2": w2, "b2": b2, "w3": w3, "b3": b3}


def _reference(raw_nchw, z_onehot, params):
    """Pure-JAX f32 reference of the module's forward()."""
    hi = jax.lax.Precision.HIGHEST
    B = raw_nchw.shape[0]
    x = raw_nchw.reshape(B, -1)
    h1 = jax.nn.relu(jnp.dot(x, params["w1"], precision=hi) + params["b1"])
    cat = jnp.concatenate([h1, z_onehot], axis=1)
    h2 = jax.nn.relu(jnp.dot(cat, params["w2"], precision=hi) + params["b2"])
    return jax.nn.relu(jnp.dot(h2, params["w3"], precision=hi) + params["b3"])


if __name__ == "__main__":
    B, C, H, W = 2, 4, 16, 16
    features_dim, number_z, hidden = 32, 50, 32
    n_flatten = C * H * W

    key = jax.random.PRNGKey(0)
    k_raw, k_z, k_p = jax.random.split(key, 3)

    raw = jax.random.normal(k_raw, (B, C, H, W), jnp.float32)
    z_idx = jax.random.randint(k_z, (B,), 0, number_z)
    z_onehot = jax.nn.one_hot(z_idx, number_z, dtype=jnp.float32)

    params = init_params(k_p, n_flatten, features_dim, number_z, hidden)
    ref = _reference(raw, z_onehot, params)

    # Default (bf16 operands, f32 accumulation); tk=512 forces a 2-step K reduction so the
    # accumulator init / epilogue gating is exercised.
    out = diayn_flatten_forward(raw, z_onehot, params, tk=512)
    out = jax.block_until_ready(out)
    assert out.shape == (B, features_dim)
    assert jnp.allclose(out, ref, atol=2e-2, rtol=2e-2), "bf16 kernel mismatch vs reference"

    # f32 compute path (same tiling) as a structural sanity check.
    out_f32 = diayn_flatten_forward(raw, z_onehot, params, tk=512,
                                    compute_dtype=jnp.float32)
    out_f32 = jax.block_until_ready(out_f32)
    assert jnp.allclose(out_f32, ref, atol=2e-2, rtol=2e-2), "f32 kernel mismatch vs reference"

    print("KERNEL_OK")
</pallas_src>

<mosaic_0001>
module attributes {stable_mosaic.version = 11 : i64} {
  func.func @_diayn_kernel(%arg0: i32, %arg1: i32, %arg2: memref<2x512xbf16, #tpu.memory_space<vmem>>, %arg3: memref<512x32xbf16, #tpu.memory_space<vmem>>, %arg4: memref<2x50xbf16, #tpu.memory_space<vmem>>, %arg5: memref<1x32xf32, #tpu.memory_space<vmem>>, %arg6: memref<32x32xbf16, #tpu.memory_space<vmem>>, %arg7: memref<50x32xbf16, #tpu.memory_space<vmem>>, %arg8: memref<1x32xf32, #tpu.memory_space<vmem>>, %arg9: memref<32x32xbf16, #tpu.memory_space<vmem>>, %arg10: memref<1x32xf32, #tpu.memory_space<vmem>>, %arg11: memref<2x32xf32, #tpu.memory_space<vmem>>, %arg12: memref<2x32xf32, #tpu.memory_space<vmem>>) attributes {dimension_semantics = [#tpu.dimension_semantics<parallel>, #tpu.dimension_semantics<arbitrary>], iteration_bounds = array<i64: 1, 2>, scalar_prefetch = 0 : i64, scratch_operands = 1 : i64, tpu.core_type = #tpu.core_type<tc>, window_params = [{transform_indices = @transform_0, window_bounds = array<i64: 2, 512>}, {transform_indices = @transform_1, window_bounds = array<i64: 512, 32>}, {transform_indices = @transform_2, window_bounds = array<i64: 2, 50>}, {pipeline_mode = #tpu.pipeline_mode<synchronous>, transform_indices = @transform_3, window_bounds = array<i64: 1, 32>}, {pipeline_mode = #tpu.pipeline_mode<synchronous>, transform_indices = @transform_4, window_bounds = array<i64: 32, 32>}, {pipeline_mode = #tpu.pipeline_mode<synchronous>, transform_indices = @transform_5, window_bounds = array<i64: 50, 32>}, {pipeline_mode = #tpu.pipeline_mode<synchronous>, transform_indices = @transform_6, window_bounds = array<i64: 1, 32>}, {pipeline_mode = #tpu.pipeline_mode<synchronous>, transform_indices = @transform_7, window_bounds = array<i64: 32, 32>}, {pipeline_mode = #tpu.pipeline_mode<synchronous>, transform_indices = @transform_8, window_bounds = array<i64: 1, 32>}, {transform_indices = @transform_9, window_bounds = array<i64: 2, 32>}]} {
    %c0_i32 = arith.constant 0 : i32
    %0 = arith.cmpi eq, %arg1, %c0_i32 : i32
    %1 = arith.extui %0 : i1 to i32
    %c0_i32_0 = arith.constant 0 : i32
    %2 = arith.cmpi ne, %1, %c0_i32_0 : i32
    scf.if %2 {
      %cst_9 = arith.constant 0.000000e+00 : f32
      %12 = vector.broadcast %cst_9 : f32 to vector<2x32xf32>
      %c0_10 = arith.constant 0 : index
      %c0_11 = arith.constant 0 : index
      %13 = vector.load %arg12[%c0_10, %c0_11] : memref<2x32xf32, #tpu.memory_space<vmem>>, vector<2x32xf32>
      tpu.vector_store %arg12[%c0_10, %c0_11], %12 {strides = array<i32>} : memref<2x32xf32, #tpu.memory_space<vmem>>, vector<2x32xf32>,
    } else {
    }
    %c0 = arith.constant 0 : index
    %c0_1 = arith.constant 0 : index
    %3 = vector.load %arg12[%c0, %c0_1] : memref<2x32xf32, #tpu.memory_space<vmem>>, vector<2x32xf32>
    %c0_2 = arith.constant 0 : index
    %c0_3 = arith.constant 0 : index
    %4 = vector.load %arg2[%c0_2, %c0_3] : memref<2x512xbf16, #tpu.memory_space<vmem>>, vector<2x512xbf16>
    %c0_4 = arith.constant 0 : index
    %c0_5 = arith.constant 0 : index
    %5 = vector.load %arg3[%c0_4, %c0_5] : memref<512x32xbf16, #tpu.memory_space<vmem>>, vector<512x32xbf16>
    %cst = arith.constant dense<0.000000e+00> : vector<2x32xf32>
    %6 = tpu.matmul %4, %5, %cst {dimension_numbers = #tpu.dot_dimension_numbers<[1], [0], [0], [1], [0, 0, 1, 1], [], []>} : vector<2x512xbf16>, vector<512x32xbf16>, vector<2x32xf32> -> vector<2x32xf32>
    %7 = arith.addf %3, %6 : vector<2x32xf32>
    %c0_6 = arith.constant 0 : index
    %c0_7 = arith.constant 0 : index
    %8 = vector.load %arg12[%c0_6, %c0_7] : memref<2x32xf32, #tpu.memory_space<vmem>>, vector<2x32xf32>
    tpu.vector_store %arg12[%c0_6, %c0_7], %7 {strides = array<i32>} : memref<2x32xf32, #tpu.memory_space<vmem>>, vector<2x32xf32>,
    %c1_i32 = arith.constant 1 : i32
    %9 = arith.cmpi eq, %arg1, %c1_i32 : i32
    %10 = arith.extui %9 : i1 to i32
    %c0_i32_8 = arith.constant 0 : i32
    %11 = arith.cmpi ne, %10, %c0_i32_8 : i32
    scf.if %11 {
      %c0_9 = arith.constant 0 : index
      %c0_10 = arith.constant 0 : index
      %12 = vector.load %arg12[%c0_9, %c0_10] : memref<2x32xf32, #tpu.memory_space<vmem>>, vector<2x32xf32>
      %c0_11 = arith.constant 0 : index
      %c0_12 = arith.constant 0 : index
      %13 = vector.load %arg5[%c0_11, %c0_12] : memref<1x32xf32, #tpu.memory_space<vmem>>, vector<1x32xf32>
      %14 = vector.broadcast %13 : vector<1x32xf32> to vector<2x32xf32>
      %15 = arith.addf %12, %14 : vector<2x32xf32>
      %cst_13 = arith.constant 0.000000e+00 : f32
      %16 = vector.broadcast %cst_13 : f32 to vector<2x32xf32>
      %17 = arith.maximumf %15, %16 : vector<2x32xf32>
      %18 = arith.truncf %17 : vector<2x32xf32> to vector<2x32xbf16>
      %c0_14 = arith.constant 0 : index
      %c0_15 = arith.constant 0 : index
      %19 = vector.load %arg6[%c0_14, %c0_15] : memref<32x32xbf16, #tpu.memory_space<vmem>>, vector<32x32xbf16>
      %cst_16 = arith.constant dense<0.000000e+00> : vector<2x32xf32>
      %20 = tpu.matmul %18, %19, %cst_16 {dimension_numbers = #tpu.dot_dimension_numbers<[1], [0], [0], [1], [0, 0, 1, 1], [], []>} : vector<2x32xbf16>, vector<32x32xbf16>, vector<2x32xf32> -> vector<2x32xf32>
      %c0_17 = arith.constant 0 : index
      %c0_18 = arith.constant 0 : index
      %21 = vector.load %arg4[%c0_17, %c0_18] : memref<2x50xbf16, #tpu.memory_space<vmem>>, vector<2x50xbf16>
      %c0_19 = arith.constant 0 : index
      %c0_20 = arith.constant 0 : index
      %22 = vector.load %arg7[%c0_19, %c0_20] : memref<50x32xbf16, #tpu.memory_space<vmem>>, vector<50x32xbf16>
      %cst_21 = arith.constant dense<0.000000e+00> : vector<2x32xf32>
      %23 = tpu.matmul %21, %22, %cst_21 {dimension_numbers = #tpu.dot_dimension_numbers<[1], [0], [0], [1], [0, 0, 1, 1], [], []>} : vector<2x50xbf16>, vector<50x32xbf16>, vector<2x32xf32> -> vector<2x32xf32>
      %24 = arith.addf %20, %23 : vector<2x32xf32>
      %c0_22 = arith.constant 0 : index
      %c0_23 = arith.constant 0 : index
      %25 = vector.load %arg8[%c0_22, %c0_23] : memref<1x32xf32, #tpu.memory_space<vmem>>, vector<1x32xf32>
      %26 = vector.broadcast %25 : vector<1x32xf32> to vector<2x32xf32>
      %27 = arith.addf %24, %26 : vector<2x32xf32>
      %cst_24 = arith.constant 0.000000e+00 : f32
      %28 = vector.broadcast %cst_24 : f32 to vector<2x32xf32>
      %29 = arith.maximumf %27, %28 : vector<2x32xf32>
      %30 = arith.truncf %29 : vector<2x32xf32> to vector<2x32xbf16>
      %c0_25 = arith.constant 0 : index
      %c0_26 = arith.constant 0 : index
      %31 = vector.load %arg9[%c0_25, %c0_26] : memref<32x32xbf16, #tpu.memory_space<vmem>>, vector<32x32xbf16>
      %cst_27 = arith.constant dense<0.000000e+00> : vector<2x32xf32>
      %32 = tpu.matmul %30, %31, %cst_27 {dimension_numbers = #tpu.dot_dimension_numbers<[1], [0], [0], [1], [0, 0, 1, 1], [], []>} : vector<2x32xbf16>, vector<32x32xbf16>, vector<2x32xf32> -> vector<2x32xf32>
      %c0_28 = arith.constant 0 : index
      %c0_29 = arith.constant 0 : index
      %33 = vector.load %arg10[%c0_28, %c0_29] : memref<1x32xf32, #tpu.memory_space<vmem>>, vector<1x32xf32>
      %34 = vector.broadcast %33 : vector<1x32xf32> to vector<2x32xf32>
      %35 = arith.addf %32, %34 : vector<2x32xf32>
      %cst_30 = arith.constant 0.000000e+00 : f32
      %36 = vector.broadcast %cst_30 : f32 to vector<2x32xf32>
      %37 = arith.maximumf %35, %36 : vector<2x32xf32>
      %c0_31 = arith.constant 0 : index
      %c0_32 = arith.constant 0 : index
      %38 = vector.load %arg11[%c0_31, %c0_32] : memref<2x32xf32, #tpu.memory_space<vmem>>, vector<2x32xf32>
      tpu.vector_store %arg11[%c0_31, %c0_32], %37 {strides = array<i32>} : memref<2x32xf32, #tpu.memory_space<vmem>>, vector<2x32xf32>,
    } else {
    }
    return
  }
  func.func @transform_0(%arg0: i32, %arg1: i32) -> (i32, i32) {
    %c0_i32 = arith.constant 0 : i32
    return %arg0, %arg1 : i32, i32
  }
  func.func @transform_1(%arg0: i32, %arg1: i32) -> (i32, i32) {
    %c0_i32 = arith.constant 0 : i32
    %c0_i32_0 = arith.constant 0 : i32
    return %arg1, %c0_i32 : i32, i32
  }
  func.func @transform_2(%arg0: i32, %arg1: i32) -> (i32, i32) {
    %c0_i32 = arith.constant 0 : i32
    %c0_i32_0 = arith.constant 0 : i32
    return %arg0, %c0_i32 : i32, i32
  }
  func.func @transform_3(%arg0: i32, %arg1: i32) -> (i32, i32) {
    %c0_i32 = arith.constant 0 : i32
    %c0_i32_0 = arith.constant 0 : i32
    %c0_i32_1 = arith.constant 0 : i32
    return %c0_i32, %c0_i32_0 : i32, i32
  }
  func.func @transform_4(%arg0: i32, %arg1: i32) -> (i32, i32) {
    %c0_i32 = arith.constant 0 : i32
    %c0_i32_0 = arith.constant 0 : i32
    %c0_i32_1 = arith.constant 0 : i32
    return %c0_i32, %c0_i32_0 : i32, i32
  }
  func.func @transform_5(%arg0: i32, %arg1: i32) -> (i32, i32) {
    %c0_i32 = arith.constant 0 : i32
    %c0_i32_0 = arith.constant 0 : i32
    %c0_i32_1 = arith.constant 0 : i32
    return %c0_i32, %c0_i32_0 : i32, i32
  }
  func.func @transform_6(%arg0: i32, %arg1: i32) -> (i32, i32) {
    %c0_i32 = arith.constant 0 : i32
    %c0_i32_0 = arith.constant 0 : i32
    %c0_i32_1 = arith.constant 0 : i32
    return %c0_i32, %c0_i32_0 : i32, i32
  }
  func.func @transform_7(%arg0: i32, %arg1: i32) -> (i32, i32) {
    %c0_i32 = arith.constant 0 : i32
    %c0_i32_0 = arith.constant 0 : i32
    %c0_i32_1 = arith.constant 0 : i32
    return %c0_i32, %c0_i32_0 : i32, i32
  }
  func.func @transform_8(%arg0: i32, %arg1: i32) -> (i32, i32) {
    %c0_i32 = arith.constant 0 : i32
    %c0_i32_0 = arith.constant 0 : i32
    %c0_i32_1 = arith.constant 0 : i32
    return %c0_i32, %c0_i32_0 : i32, i32
  }
  func.func @transform_9(%arg0: i32, %arg1: i32) -> (i32, i32) {
    %c0_i32 = arith.constant 0 : i32
    %c0_i32_0 = arith.constant 0 : i32
    return %arg0, %c0_i32 : i32, i32
  }
}

</mosaic_0001>

<llo_original>
// kernel: tpu_custom_call.1
$region0: #{tpu_custom_call.1}
  #allocation0 [shape = 'u32[]', space=smem, size = 0x4, offset = 0x4, fixed_abs, tag = 'smem constant byte address 0x4 - core index']
  #allocation1 [shape = 'u32[144,128]{1,0:T(1,128)}', space=vmem, size = 0x12000, scoped, tag = 'internal scratch']
  #allocation2 [shape = 'f32[2,32]{1,0:T(2,128)}', space=vmem, size = 0x400, scoped, tag = 'scratch operand']
  %s0 = inlined_call_operand.vmem [shape: bf16[2,1024], index: 0, kind: input, shape index: {}]
  %s1 = inlined_call_operand.vmem [shape: bf16[1024,32], index: 1, kind: input, shape index: {}]
  %s2 = inlined_call_operand.vmem [shape: bf16[2,50], index: 2, kind: input, shape index: {}]
  %s3 = inlined_call_operand.vmem [shape: f32[1,32], index: 3, kind: input, shape index: {}]
  %s4 = inlined_call_operand.vmem [shape: bf16[32,32], index: 4, kind: input, shape index: {}]
  %s5 = inlined_call_operand.vmem [shape: bf16[50,32], index: 5, kind: input, shape index: {}]
  %s6 = inlined_call_operand.vmem [shape: f32[1,32], index: 6, kind: input, shape index: {}]
  %s7 = inlined_call_operand.vmem [shape: bf16[32,32], index: 7, kind: input, shape index: {}]
  %s8 = inlined_call_operand.vmem [shape: f32[1,32], index: 8, kind: input, shape index: {}]
  %s9 = inlined_call_operand.hbm [shape: f32[2,32], index: 9, kind: output, shape index: {}]
  %s10 = sld [smem:[#allocation0]]
  $region77: #{tpu_custom_call.1} parent=0
    _
  %s12 = ssub.s32 1, %s10
  %s13 = scalar_select 0, %s12, %s10
  $region1: #{tpu_custom_call.1} parent=0
    #allocation3 [shape = 'u8[1024]{0}', space=vmem, size = 0x400, scoped, tag = 'output window, operand 0, single buffered']
    #allocation4 [shape = 's32[2]{0}', space=sflag, size = 0x8, scoped, tag = 'scoped memory for tpu_custom_call.1']
    %14 = vsyncpa [#allocation4], 0
    loop: start=0, step=1, limit=4
    $region2: #{tpu_custom_call.1} parent=1 // loop_pre_header
      _
    $region3: #{tpu_custom_call.1} parent=1 // loop_header
      %s16 = sphi 0, %s20
      %p17 = scmp.ge.s32.totalorder %s16, 4
      %s23 = sphi 0, %s35
      %s24 = sphi 0, %s31
      %s25 = sphi 0, %s23
      %s26 = sphi 0, %s24
      %s27 = sphi 0, %s25
      %s28 = sphi 0, %s26
      %s40 = sphi 0, %s42
      %s43 = sphi 0, %s40
      %s44 = sphi 0, %s43
      %s60 = sphi 0, %s44
      %s66 = sphi 0, %s68
      %s69 = sphi 0, %s66
      %s70 = sphi 0, %s69
      %s86 = sphi 0, %s70
      %s92 = sphi 0, %s94
      %s95 = sphi 0, %s92
      %s96 = sphi 0, %s95
      %s112 = sphi 0, %s96
      %s116 = sphi 0, %s116
      %s118 = sphi 0, %s116
      %s119 = sphi 0, %s118
      %s133 = sphi 0, %s119
      %s137 = sphi 0, %s137
      %s139 = sphi 0, %s137
      %s140 = sphi 0, %s139
      %s154 = sphi 0, %s140
      %s158 = sphi 0, %s158
      %s160 = sphi 0, %s158
      %s161 = sphi 0, %s160
      %s175 = sphi 0, %s161
      %s179 = sphi 0, %s179
      %s181 = sphi 0, %s179
      %s182 = sphi 0, %s181
      %s196 = sphi 0, %s182
      %s200 = sphi 0, %s200
      %s202 = sphi 0, %s200
      %s203 = sphi 0, %s202
      %s217 = sphi 0, %s203
      %s221 = sphi 0, %s221
      %s223 = sphi 0, %s221
      %s224 = sphi 0, %s223
      %s238 = sphi 0, %s224
      %s244 = sphi 0, %s246
      %s247 = sphi 0, %s244
      %s248 = sphi 0, %s247
      %s264 = sphi 0, %s248
    $region4: #{tpu_custom_call.1} parent=1 // loop_header_branch
      %19 = sbr.rel (%p17) target = $region8
    $region5: #{tpu_custom_call.1} parent=1 // loop_body
      %s21 = ssub.s32 %s16, 1
      %s22 = ssub.s32 %s16, 2
      %s29 = sadd.s32 1, %s24
      %p30 = scmp.ge.s32.totalorder %s29, 2
      %s31 = scalar_select %p30, 0, %s29
      %s32 = sadd.s32 1, %s23
      %s33 = scalar_select %p30, %s32, %s23
      %p34 = scmp.ge.s32.totalorder %s33, 1
      %s35 = scalar_select %p34, 0, %s33
      %s36 = ssub.s32 %s23, %s35
      %s37 = ssub.s32 %s24, %s31
      %s38 = sor.u32 %s36, %s37
      %p39 = scmp.eq.s32.totalorder %s38, 0
      %s41 = sadd.s32 %s40, 1
      %s42 = scalar_select %p39, %s40, %s41
      %p45 = pneg %p39
      %p46 = scmp.eq.s32.totalorder %s16, 1
      %p47 = por %p45, %p46
      %p48 = scmp.ne.s32.totalorder %s40, %s43
      %p49 = scmp.eq.s32.totalorder %s16, 0
      %p50 = por %p48, %p49
      %p51 = scmp.ne.s32.totalorder %s40, %s43
      %p52 = scmp.eq.s32.totalorder %s21, 1
      %p53 = por %p51, %p52
      %p54 = scmp.ne.s32.totalorder %s43, %s44
      %p55 = scmp.eq.s32.totalorder %s21, 0
      %p56 = por %p54, %p55
      %p57 = scmp.ne.s32.totalorder %s43, %s44
      %p58 = scmp.eq.s32.totalorder %s22, 1
      %p59 = por %p57, %p58
      %p61 = scmp.ne.s32.totalorder %s44, %s60
      %p62 = scmp.eq.s32.totalorder %s22, 0
      %p63 = por %p61, %p62
      %s64 = ssub.s32 %s24, %s31
      %p65 = scmp.eq.s32.totalorder %s64, 0
      %s67 = sadd.s32 %s66, 1
      %s68 = scalar_select %p65, %s66, %s67
      %p71 = pneg %p65
      %p72 = scmp.eq.s32.totalorder %s16, 1
      %p73 = por %p71, %p72
      %p74 = scmp.ne.s32.totalorder %s66, %s69
      %p75 = scmp.eq.s32.totalorder %s16, 0
      %p76 = por %p74, %p75
      %p77 = scmp.ne.s32.totalorder %s66, %s69
      %p78 = scmp.eq.s32.totalorder %s21, 1
      %p79 = por %p77, %p78
      %p80 = scmp.ne.s32.totalorder %s69, %s70
      %p81 = scmp.eq.s32.totalorder %s21, 0
      %p82 = por %p80, %p81
      %p83 = scmp.ne.s32.totalorder %s69, %s70
      %p84 = scmp.eq.s32.totalorder %s22, 1
      %p85 = por %p83, %p84
      %p87 = scmp.ne.s32.totalorder %s70, %s86
      %p88 = scmp.eq.s32.totalorder %s22, 0
      %p89 = por %p87, %p88
      %s90 = ssub.s32 %s23, %s35
      %p91 = scmp.eq.s32.totalorder %s90, 0
      %s93 = sadd.s32 %s92, 1
      %s94 = scalar_select %p91, %s92, %s93
      %p97 = pneg %p91
      %p98 = scmp.eq.s32.totalorder %s16, 1
      %p99 = por %p97, %p98
      %p100 = scmp.ne.s32.totalorder %s92, %s95
      %p101 = scmp.eq.s32.totalorder %s16, 0
      %p102 = por %p100, %p101
      %p103 = scmp.ne.s32.totalorder %s92, %s95
      %p104 = scmp.eq.s32.totalorder %s21, 1
      %p105 = por %p103, %p104
      %p106 = scmp.ne.s32.totalorder %s95, %s96
      %p107 = scmp.eq.s32.totalorder %s21, 0
      %p108 = por %p106, %p107
      %p109 = scmp.ne.s32.totalorder %s95, %s96
      %p110 = scmp.eq.s32.totalorder %s22, 1
      %p111 = por %p109, %p110
      %p113 = scmp.ne.s32.totalorder %s96, %s112
      %p114 = scmp.eq.s32.totalorder %s22, 0
      %p115 = por %p113, %p114
      %s117 = sadd.s32 %s116, 1
      %p120 = scmp.eq.s32.totalorder %s16, 1
      %p121 = scmp.ne.s32.totalorder %s116, %s118
      %p122 = scmp.eq.s32.totalorder %s16, 0
      %p123 = por %p121, %p122
      %p124 = scmp.ne.s32.totalorder %s116, %s118
      %p125 = scmp.eq.s32.totalorder %s21, 1
      %p126 = por %p124, %p125
      %p127 = scmp.ne.s32.totalorder %s118, %s119
      %p128 = scmp.eq.s32.totalorder %s21, 0
      %p129 = por %p127, %p128
      %p130 = scmp.ne.s32.totalorder %s118, %s119
      %p131 = scmp.eq.s32.totalorder %s22, 1
      %p132 = por %p130, %p131
      %p134 = scmp.ne.s32.totalorder %s119, %s133
      %p135 = scmp.eq.s32.totalorder %s22, 0
      %p136 = por %p134, %p135
      %s138 = sadd.s32 %s137, 1
      %p141 = scmp.eq.s32.totalorder %s16, 1
      %p142 = scmp.ne.s32.totalorder %s137, %s139
      %p143 = scmp.eq.s32.totalorder %s16, 0
      %p144 = por %p142, %p143
      %p145 = scmp.ne.s32.totalorder %s137, %s139
      %p146 = scmp.eq.s32.totalorder %s21, 1
      %p147 = por %p145, %p146
      %p148 = scmp.ne.s32.totalorder %s139, %s140
      %p149 = scmp.eq.s32.totalorder %s21, 0
      %p150 = por %p148, %p149
      %p151 = scmp.ne.s32.totalorder %s139, %s140
      %p152 = scmp.eq.s32.totalorder %s22, 1
      %p153 = por %p151, %p152
      %p155 = scmp.ne.s32.totalorder %s140, %s154
      %p156 = scmp.eq.s32.totalorder %s22, 0
      %p157 = por %p155, %p156
      %s159 = sadd.s32 %s158, 1
      %p162 = scmp.eq.s32.totalorder %s16, 1
      %p163 = scmp.ne.s32.totalorder %s158, %s160
      %p164 = scmp.eq.s32.totalorder %s16, 0
      %p165 = por %p163, %p164
      %p166 = scmp.ne.s32.totalorder %s158, %s160
      %p167 = scmp.eq.s32.totalorder %s21, 1
      %p168 = por %p166, %p167
      %p169 = scmp.ne.s32.totalorder %s160, %s161
      %p170 = scmp.eq.s32.totalorder %s21, 0
      %p171 = por %p169, %p170
      %p172 = scmp.ne.s32.totalorder %s160, %s161
      %p173 = scmp.eq.s32.totalorder %s22, 1
      %p174 = por %p172, %p173
      %p176 = scmp.ne.s32.totalorder %s161, %s175
      %p177 = scmp.eq.s32.totalorder %s22, 0
      %p178 = por %p176, %p177
      %s180 = sadd.s32 %s179, 1
      %p183 = scmp.eq.s32.totalorder %s16, 1
      %p184 = scmp.ne.s32.totalorder %s179, %s181
      %p185 = scmp.eq.s32.totalorder %s16, 0
      %p186 = por %p184, %p185
      %p187 = scmp.ne.s32.totalorder %s179, %s181
      %p188 = scmp.eq.s32.totalorder %s21, 1
      %p189 = por %p187, %p188
      %p190 = scmp.ne.s32.totalorder %s181, %s182
      %p191 = scmp.eq.s32.totalorder %s21, 0
      %p192 = por %p190, %p191
      %p193 = scmp.ne.s32.totalorder %s181, %s182
      %p194 = scmp.eq.s32.totalorder %s22, 1
      %p195 = por %p193, %p194
      %p197 = scmp.ne.s32.totalorder %s182, %s196
      %p198 = scmp.eq.s32.totalorder %s22, 0
      %p199 = por %p197, %p198
      %s201 = sadd.s32 %s200, 1
      %p204 = scmp.eq.s32.totalorder %s16, 1
      %p205 = scmp.ne.s32.totalorder %s200, %s202
      %p206 = scmp.eq.s32.totalorder %s16, 0
      %p207 = por %p205, %p206
      %p208 = scmp.ne.s32.totalorder %s200, %s202
      %p209 = scmp.eq.s32.totalorder %s21, 1
      %p210 = por %p208, %p209
      %p211 = scmp.ne.s32.totalorder %s202, %s203
      %p212 = scmp.eq.s32.totalorder %s21, 0
      %p213 = por %p211, %p212
      %p214 = scmp.ne.s32.totalorder %s202, %s203
      %p215 = scmp.eq.s32.totalorder %s22, 1
      %p216 = por %p214, %p215
      %p218 = scmp.ne.s32.totalorder %s203, %s217
      %p219 = scmp.eq.s32.totalorder %s22, 0
      %p220 = por %p218, %p219
      %s222 = sadd.s32 %s221, 1
      %p225 = scmp.eq.s32.totalorder %s16, 1
      %p226 = scmp.ne.s32.totalorder %s221, %s223
      %p227 = scmp.eq.s32.totalorder %s16, 0
      %p228 = por %p226, %p227
      %p229 = scmp.ne.s32.totalorder %s221, %s223
      %p230 = scmp.eq.s32.totalorder %s21, 1
      %p231 = por %p229, %p230
      %p232 = scmp.ne.s32.totalorder %s223, %s224
      %p233 = scmp.eq.s32.totalorder %s21, 0
      %p234 = por %p232, %p233
      %p235 = scmp.ne.s32.totalorder %s223, %s224
      %p236 = scmp.eq.s32.totalorder %s22, 1
      %p237 = por %p235, %p236
      %p239 = scmp.ne.s32.totalorder %s224, %s238
      %p240 = scmp.eq.s32.totalorder %s22, 0
      %p241 = por %p239, %p240
      %s242 = ssub.s32 %s23, %s35
      %p243 = scmp.eq.s32.totalorder %s242, 0
      %s245 = sadd.s32 %s244, 1
      %s246 = scalar_select %p243, %s244, %s245
      %p249 = pneg %p243
      %p250 = scmp.eq.s32.totalorder %s16, 1
      %p251 = por %p249, %p250
      %p252 = scmp.ne.s32.totalorder %s244, %s247
      %p253 = scmp.eq.s32.totalorder %s16, 0
      %p254 = por %p252, %p253
      %p255 = scmp.ne.s32.totalorder %s244, %s247
      %p256 = scmp.eq.s32.totalorder %s21, 1
      %p257 = por %p255, %p256
      %p258 = scmp.ne.s32.totalorder %s247, %s248
      %p259 = scmp.eq.s32.totalorder %s21, 0
      %p260 = por %p258, %p259
      %p261 = scmp.ne.s32.totalorder %s247, %s248
      %p262 = scmp.eq.s32.totalorder %s22, 1
      %p263 = por %p261, %p262
      %p265 = scmp.ne.s32.totalorder %s248, %s264
      %p266 = scmp.eq.s32.totalorder %s22, 0
      %p267 = por %p265, %p266
      %p268 = scmp.le.s32.totalorder 1, %s16
      %p269 = scmp.lt.s32.totalorder %s16, 3
      %p270 = pnand %p268, %p269
      %p271 = pneg %p270
      // Predicated region
      $region9: #{tpu_custom_call.1} parent=5 // pred_check
        _
      $region10: #{tpu_custom_call.1} parent=5 // pred_check_branch
        %273 = sbr.rel (%p270) target = $region12
      $region11: #{tpu_custom_call.1} parent=5 // pred_region
        %s274 = ssub.s32 %s16, 1
        // Predicated region
        $region13: #{tpu_custom_call.1} parent=11 // pred_check
          %p275 = pneg %p108
        $region14: #{tpu_custom_call.1} parent=11 // pred_check_branch
          %277 = sbr.rel (%p275) target = $region16
        $region15: #{tpu_custom_call.1} parent=11 // pred_region
          %p278 = scmp.lt.s32.totalorder %s25, 0
          %s279 = scalar_select %p278, %s25, 0
          %s280 = scalar_lea.vmem %s2, %s279
        $region16: #{tpu_custom_call.1} parent=11 // pred_fallthru
          _
        // Predicated region
        $region17: #{tpu_custom_call.1} parent=11 // pred_check
          %p281 = pneg %p129
        $region18: #{tpu_custom_call.1} parent=11 // pred_check_branch
          %283 = sbr.rel (%p281) target = $region20
        $region19: #{tpu_custom_call.1} parent=11 // pred_region
          _
        $region20: #{tpu_custom_call.1} parent=11 // pred_fallthru
          _
        // Predicated region
        $region21: #{tpu_custom_call.1} parent=11 // pred_check
          %p284 = pneg %p150
        $region22: #{tpu_custom_call.1} parent=11 // pred_check_branch
          %286 = sbr.rel (%p284) target = $region24
        $region23: #{tpu_custom_call.1} parent=11 // pred_region
          _
        $region24: #{tpu_custom_call.1} parent=11 // pred_fallthru
          _
        // Predicated region
        $region25: #{tpu_custom_call.1} parent=11 // pred_check
          %p287 = pneg %p171
        $region26: #{tpu_custom_call.1} parent=11 // pred_check_branch
          %289 = sbr.rel (%p287) target = $region28
        $region27: #{tpu_custom_call.1} parent=11 // pred_region
          _
        $region28: #{tpu_custom_call.1} parent=11 // pred_fallthru
          _
        // Predicated region
        $region29: #{tpu_custom_call.1} parent=11 // pred_check
          %p290 = pneg %p192
        $region30: #{tpu_custom_call.1} parent=11 // pred_check_branch
          %292 = sbr.rel (%p290) target = $region32
        $region31: #{tpu_custom_call.1} parent=11 // pred_region
          _
        $region32: #{tpu_custom_call.1} parent=11 // pred_fallthru
          _
        // Predicated region
        $region33: #{tpu_custom_call.1} parent=11 // pred_check
          %p293 = pneg %p213
        $region34: #{tpu_custom_call.1} parent=11 // pred_check_branch
          %295 = sbr.rel (%p293) target = $region36
        $region35: #{tpu_custom_call.1} parent=11 // pred_region
          _
        $region36: #{tpu_custom_call.1} parent=11 // pred_fallthru
          _
        // Predicated region
        $region37: #{tpu_custom_call.1} parent=11 // pred_check
          %p296 = pneg %p234
        $region38: #{tpu_custom_call.1} parent=11 // pred_check_branch
          %298 = sbr.rel (%p296) target = $region40
        $region39: #{tpu_custom_call.1} parent=11 // pred_region
          _
        $region40: #{tpu_custom_call.1} parent=11 // pred_fallthru
          _
      $region12: #{tpu_custom_call.1} parent=5 // pred_fallthru
        _
      %p299 = scmp.lt.s32.totalorder %s16, 2
      // Predicated region
      $region41: #{tpu_custom_call.1} parent=5 // pred_check
        %p300 = pneg %p299
      $region42: #{tpu_custom_call.1} parent=5 // pred_check_branch
        %302 = sbr.rel (%p300) target = $region44
      $region43: #{tpu_custom_call.1} parent=5 // pred_region
        // Predicated region
        $region45: #{tpu_custom_call.1} parent=43 // pred_check
          %p303 = pneg %p50
        $region46: #{tpu_custom_call.1} parent=43 // pred_check_branch
          %305 = sbr.rel (%p303) target = $region48
        $region47: #{tpu_custom_call.1} parent=43 // pred_region
          %s306 = smul.u32 4, %s24
          %p307 = scmp.lt.s32.totalorder %s23, 0
          %s308 = scalar_select %p307, %s23, 0
          %p309 = scmp.lt.s32.totalorder %s306, 7
          %s310 = scalar_select %p309, %s306, 7
          %s311 = smul.addr %s308, 8
          %s312 = sadd.s32 %s310, %s311
          %s313 = scalar_lea.vmem %s0, %s312
          %s314 = smul.u32 4, %s24
        $region48: #{tpu_custom_call.1} parent=43 // pred_fallthru
          _
        // Predicated region
        $region49: #{tpu_custom_call.1} parent=43 // pred_check
          %p315 = pneg %p76
        $region50: #{tpu_custom_call.1} parent=43 // pred_check_branch
          %317 = sbr.rel (%p315) target = $region52
        $region51: #{tpu_custom_call.1} parent=43 // pred_region
          %s318 = smul.u32 64, %s24
          %p319 = scmp.lt.s32.totalorder %s318, 127
          %s320 = scalar_select %p319, %s318, 127
          %s321 = smul.addr %s320, 4
          %s322 = scalar_lea.vmem %s1, %s321
          %s323 = smul.u32 64, %s24
        $region52: #{tpu_custom_call.1} parent=43 // pred_fallthru
          _
      $region44: #{tpu_custom_call.1} parent=5 // pred_fallthru
        _
      %p324 = scmp.le.s32.totalorder 1, %s16
      %p325 = scmp.lt.s32.totalorder %s16, 3
      %p326 = pnand %p324, %p325
      %p327 = pneg %p326
      // Predicated region
      $region53: #{tpu_custom_call.1} parent=5 // pred_check
        _
      $region54: #{tpu_custom_call.1} parent=5 // pred_check_branch
        %329 = sbr.rel (%p326) target = $region56
      $region55: #{tpu_custom_call.1} parent=5 // pred_region
        %s330 = ssub.s32 %s16, 1
        %s331 = smul.u32 4, %s26
        %p332 = scmp.lt.s32.totalorder %s25, 0
        %s333 = scalar_select %p332, %s25, 0
        %p334 = scmp.lt.s32.totalorder %s331, 7
        %s335 = scalar_select %p334, %s331, 7
        %s336 = smul.addr %s333, 8
        %s337 = sadd.s32 %s335, %s336
        %s338 = scalar_lea.vmem %s0, %s337
        %p339 = pneg %p56
        %p340 = pneg %p53
        %s341 = smul.u32 64, %s26
        %p342 = scmp.lt.s32.totalorder %s341, 127
        %s343 = scalar_select %p342, %s341, 127
        %s344 = smul.addr %s343, 4
        %s345 = scalar_lea.vmem %s1, %s344
        %p346 = pneg %p82
        %p347 = pneg %p79
        %p348 = scmp.lt.s32.totalorder %s25, 0
        %s349 = scalar_select %p348, %s25, 0
        %s350 = scalar_lea.vmem %s2, %s349
        %p351 = pneg %p108
        %p352 = pneg %p105
        %p353 = pneg %p129
        %p354 = pneg %p126
        %p355 = pneg %p150
        %p356 = pneg %p147
        %p357 = pneg %p171
        %p358 = pneg %p168
        %p359 = pneg %p192
        %p360 = pneg %p189
        %p361 = pneg %p213
        %p362 = pneg %p210
        %p363 = pneg %p234
        %p364 = pneg %p231
        %p365 = pneg %p260
        %p366 = pneg %p257
        %s367 = smul.u32 4, %s26
        %p368 = scmp.lt.s32.totalorder %s25, 0
        %s369 = scalar_select %p368, %s25, 0
        %p370 = scmp.lt.s32.totalorder %s367, 7
        %s371 = scalar_select %p370, %s367, 7
        %s372 = smul.addr %s369, 8
        %s373 = sadd.s32 %s371, %s372
        %s374 = scalar_lea.vmem %s0, %s373
        %s375 = smul.u32 4, %s26
        %s376 = smul.u32 64, %s26
        %p377 = scmp.lt.s32.totalorder %s376, 127
        %s378 = scalar_select %p377, %s376, 127
        %s379 = smul.addr %s378, 4
        %s380 = scalar_lea.vmem %s1, %s379
        %s381 = smul.u32 64, %s26
        %p382 = scmp.lt.s32.totalorder %s25, 0
        %s383 = scalar_select %p382, %s25, 0
        %s384 = scalar_lea.vmem %s2, %s383
        %p386 = scmp.eq.s32.totalorder %s26, 0
        // Predicated region
        $region57: #{tpu_custom_call.1} parent=55 // pred_check
          %p387 = pneg %p386
        $region58: #{tpu_custom_call.1} parent=55 // pred_check_branch
          %389 = sbr.rel (%p387) target = $region60
        $region59: #{tpu_custom_call.1} parent=55 // pred_region
          %vm390 = vcmask 254976
          %391 = vst.msk [vmem:[#allocation2] sm:$0x3] %vm390, 0.0
        $region60: #{tpu_custom_call.1} parent=55 // pred_fallthru
          _
        %v392 = vld [vmem:[#allocation2] sm:$0x3]
        %v393 = vld [vmem:[%s374] sm:$0xf]
        %v394 = vld [vmem:[%s380] sm:$0xf]
        %v395 = vld [vmem:[%s380 + $0x4] sm:$0xf]
        %v396 = vld [vmem:[%s380 + $0x8] sm:$0xf]
        %v397 = vld [vmem:[%s380 + $0xc] sm:$0xf]
        %v398 = vld [vmem:[%s380 + $0x10] sm:$0xf]
        %v399 = vld [vmem:[%s380 + $0x14] sm:$0xf]
        %v400 = vld [vmem:[%s380 + $0x18] sm:$0xf]
        %v401 = vld [vmem:[%s380 + $0x1c] sm:$0xf]
        %v402 = vld [vmem:[%s380 + $0x20] sm:$0xf]
        %v403 = vld [vmem:[%s380 + $0x24] sm:$0xf]
        %v404 = vld [vmem:[%s380 + $0x28] sm:$0xf]
        %v405 = vld [vmem:[%s380 + $0x2c] sm:$0xf]
        %v406 = vld [vmem:[%s380 + $0x30] sm:$0xf]
        %v407 = vld [vmem:[%s380 + $0x34] sm:$0xf]
        %v408 = vld [vmem:[%s380 + $0x38] sm:$0xf]
        %v409 = vld [vmem:[%s380 + $0x3c] sm:$0xf]
        %v410 = vld [vmem:[%s380 + $0x40] sm:$0xf]
        %v411 = vld [vmem:[%s380 + $0x44] sm:$0xf]
        %v412 = vld [vmem:[%s380 + $0x48] sm:$0xf]
        %v413 = vld [vmem:[%s380 + $0x4c] sm:$0xf]
        %v414 = vld [vmem:[%s380 + $0x50] sm:$0xf]
        %v415 = vld [vmem:[%s380 + $0x54] sm:$0xf]
        %v416 = vld [vmem:[%s380 + $0x58] sm:$0xf]
        %v417 = vld [vmem:[%s380 + $0x5c] sm:$0xf]
        %v418 = vld [vmem:[%s380 + $0x60] sm:$0xf]
        %v419 = vld [vmem:[%s380 + $0x64] sm:$0xf]
        %v420 = vld [vmem:[%s380 + $0x68] sm:$0xf]
        %v421 = vld [vmem:[%s380 + $0x6c] sm:$0xf]
        %v422 = vld [vmem:[%s380 + $0x70] sm:$0xf]
        %v423 = vld [vmem:[%s380 + $0x74] sm:$0xf]
        %v424 = vld [vmem:[%s380 + $0x78] sm:$0xf]
        %v425 = vld [vmem:[%s380 + $0x7c] sm:$0xf]
        %v426 = vld [vmem:[%s380 + $0x80] sm:$0xf]
        %v427 = vld [vmem:[%s380 + $0x84] sm:$0xf]
        %v428 = vld [vmem:[%s380 + $0x88] sm:$0xf]
        %v429 = vld [vmem:[%s380 + $0x8c] sm:$0xf]
        %v430 = vld [vmem:[%s380 + $0x90] sm:$0xf]
        %v431 = vld [vmem:[%s380 + $0x94] sm:$0xf]
        %v432 = vld [vmem:[%s380 + $0x98] sm:$0xf]
        %v433 = vld [vmem:[%s380 + $0x9c] sm:$0xf]
        %v434 = vld [vmem:[%s380 + $0xa0] sm:$0xf]
        %v435 = vld [vmem:[%s380 + $0xa4] sm:$0xf]
        %v436 = vld [vmem:[%s380 + $0xa8] sm:$0xf]
        %v437 = vld [vmem:[%s380 + $0xac] sm:$0xf]
        %v438 = vld [vmem:[%s380 + $0xb0] sm:$0xf]
        %v439 = vld [vmem:[%s380 + $0xb4] sm:$0xf]
        %v440 = vld [vmem:[%s380 + $0xb8] sm:$0xf]
        %v441 = vld [vmem:[%s380 + $0xbc] sm:$0xf]
        %v442 = vld [vmem:[%s380 + $0xc0] sm:$0xf]
        %v443 = vld [vmem:[%s380 + $0xc4] sm:$0xf]
        %v444 = vld [vmem:[%s380 + $0xc8] sm:$0xf]
        %v445 = vld [vmem:[%s380 + $0xcc] sm:$0xf]
        %v446 = vld [vmem:[%s380 + $0xd0] sm:$0xf]
        %v447 = vld [vmem:[%s380 + $0xd4] sm:$0xf]
        %v448 = vld [vmem:[%s380 + $0xd8] sm:$0xf]
        %v449 = vld [vmem:[%s380 + $0xdc] sm:$0xf]
        %v450 = vld [vmem:[%s380 + $0xe0] sm:$0xf]
        %v451 = vld [vmem:[%s380 + $0xe4] sm:$0xf]
        %v452 = vld [vmem:[%s380 + $0xe8] sm:$0xf]
        %v453 = vld [vmem:[%s380 + $0xec] sm:$0xf]
        %v454 = vld [vmem:[%s380 + $0xf0] sm:$0xf]
        %v455 = vld [vmem:[%s380 + $0xf4] sm:$0xf]
        %v456 = vld [vmem:[%s380 + $0xf8] sm:$0xf]
        %v457 = vld [vmem:[%s380 + $0xfc] sm:$0xf]
        %v460 = vunpack.c.l.s4 1966171168
        %v461 = vunpack.c.0.s8 %v460
        %v462 = vlaneseq
        %v463 = vshrl.u32 %v462, 7
        %v464 = vsub.s32 %v461, %v463
        %v465 = vrot.slane %v393, %v464
        %v466 = vcombine.high %v465, %v465
        %v468 = vunpack.c.l.s4 1966171168
        %v469 = vunpack.c.0.s8 %v468
        %v470 = vlaneseq
        %v471 = vshrl.u32 %v470, 7
        %v472 = vsub.s32 %v469, %v471
        %v473 = vrot.slane %v465, %v472
        %v475 = vunpack.c.l.s4 1966171168
        %v476 = vunpack.c.0.s8 %v475
        %v477 = vlaneseq
        %v478 = vshrl.u32 %v477, 7
        %v479 = vsub.s32 %v476, %v478
        %v480 = vrot.slane %v466, %v479
        %v481 = vcombine.high %v473, %v473
        %v482 = vcombine.high %v480, %v480
        %v551 = vunpack.c.l.b16 %v394
        %v552 = vunpack.c.l.b16 %v395
        %v553 = vunpack.c.l.b16 %v396
        %v554 = vunpack.c.l.b16 %v397
        %v555 = vunpack.c.l.b16 %v398
        %v556 = vunpack.c.l.b16 %v399
        %v557 = vunpack.c.l.b16 %v400
        %v558 = vunpack.c.l.b16 %v401
        %v559 = vunpack.c.l.b16 %v402
        %v560 = vunpack.c.l.b16 %v403
        %v561 = vunpack.c.l.b16 %v404
        %v562 = vunpack.c.l.b16 %v405
        %v563 = vunpack.c.l.b16 %v406
        %v564 = vunpack.c.l.b16 %v407
        %v565 = vunpack.c.l.b16 %v408
        %v566 = vunpack.c.l.b16 %v409
        %v567 = vunpack.c.l.b16 %v410
        %v568 = vunpack.c.l.b16 %v411
        %v569 = vunpack.c.l.b16 %v412
        %v570 = vunpack.c.l.b16 %v413
        %v571 = vunpack.c.l.b16 %v414
        %v572 = vunpack.c.l.b16 %v415
        %v573 = vunpack.c.l.b16 %v416
        %v574 = vunpack.c.l.b16 %v417
        %v575 = vunpack.c.l.b16 %v418
        %v576 = vunpack.c.l.b16 %v419
        %v577 = vunpack.c.l.b16 %v420
        %v578 = vunpack.c.l.b16 %v421
        %v579 = vunpack.c.l.b16 %v422
        %v580 = vunpack.c.l.b16 %v423
        %v581 = vunpack.c.l.b16 %v424
        %v582 = vunpack.c.l.b16 %v425
        %v583 = vunpack.c.l.b16 %v426
        %v584 = vunpack.c.l.b16 %v427
        %v585 = vunpack.c.l.b16 %v428
        %v586 = vunpack.c.l.b16 %v429
        %v587 = vunpack.c.l.b16 %v430
        %v588 = vunpack.c.l.b16 %v431
        %v589 = vunpack.c.l.b16 %v432
        %v590 = vunpack.c.l.b16 %v433
        %v591 = vunpack.c.l.b16 %v434
        %v592 = vunpack.c.l.b16 %v435
        %v593 = vunpack.c.l.b16 %v436
        %v594 = vunpack.c.l.b16 %v437
        %v595 = vunpack.c.l.b16 %v438
        %v596 = vunpack.c.l.b16 %v439
        %v597 = vunpack.c.l.b16 %v440
        %v598 = vunpack.c.l.b16 %v441
        %v599 = vunpack.c.l.b16 %v442
        %v600 = vunpack.c.l.b16 %v443
        %v601 = vunpack.c.l.b16 %v444
        %v602 = vunpack.c.l.b16 %v445
        %v603 = vunpack.c.l.b16 %v446
        %v604 = vunpack.c.l.b16 %v447
        %v605 = vunpack.c.l.b16 %v448
        %v606 = vunpack.c.l.b16 %v449
        %v607 = vunpack.c.l.b16 %v450
        %v608 = vunpack.c.l.b16 %v451
        %v609 = vunpack.c.l.b16 %v452
        %v610 = vunpack.c.l.b16 %v453
        %v611 = vunpack.c.l.b16 %v454
        %v612 = vunpack.c.l.b16 %v455
        %v613 = vunpack.c.l.b16 %v456
        %v614 = vunpack.c.l.b16 %v457
        %v615 = vpack.c.b16 %v552, %v551
        %v616 = vpack.c.b16 %v554, %v553
        %v617 = vpack.c.b16 %v556, %v555
        %v618 = vpack.c.b16 %v558, %v557
        %v619 = vpack.c.b16 %v560, %v559
        %v620 = vpack.c.b16 %v562, %v561
        %v621 = vpack.c.b16 %v564, %v563
        %v622 = vpack.c.b16 %v566, %v565
        %v623 = vpack.c.b16 %v568, %v567
        %v624 = vpack.c.b16 %v570, %v569
        %v625 = vpack.c.b16 %v572, %v571
        %v626 = vpack.c.b16 %v574, %v573
        %v627 = vpack.c.b16 %v576, %v575
        %v628 = vpack.c.b16 %v578, %v577
        %v629 = vpack.c.b16 %v580, %v579
        %v630 = vpack.c.b16 %v582, %v581
        %v631 = vpack.c.b16 %v584, %v583
        %v632 = vpack.c.b16 %v586, %v585
        %v633 = vpack.c.b16 %v588, %v587
        %v634 = vpack.c.b16 %v590, %v589
        %v635 = vpack.c.b16 %v592, %v591
        %v636 = vpack.c.b16 %v594, %v593
        %v637 = vpack.c.b16 %v596, %v595
        %v638 = vpack.c.b16 %v598, %v597
        %v639 = vpack.c.b16 %v600, %v599
        %v640 = vpack.c.b16 %v602, %v601
        %v641 = vpack.c.b16 %v604, %v603
        %v642 = vpack.c.b16 %v606, %v605
        %v643 = vpack.c.b16 %v608, %v607
        %v644 = vpack.c.b16 %v610, %v609
        %v645 = vpack.c.b16 %v612, %v611
        %v646 = vpack.c.b16 %v614, %v613
        %679 = vmatprep.subr.bf16.mxu0 0
        %680 = vmatpush1.bf16.msra.mxu0 %v615
        %681 = vmatprep.subr.bf16.mxu0 0
        %682 = vmatpush1.bf16.msra.mxu0 %v616
        %683 = vmatprep.subr.bf16.mxu0 0
        %684 = vmatpush1.bf16.msra.mxu0 %v617
        %685 = vmatprep.subr.bf16.mxu0 0
        %686 = vmatpush1.bf16.msra.mxu0 %v618
        %687 = vmatprep.subr.bf16.mxu0 0
        %688 = vmatpush1.bf16.msra.mxu0 %v619
        %689 = vmatprep.subr.bf16.mxu0 0
        %690 = vmatpush1.bf16.msra.mxu0 %v620
        %691 = vmatprep.subr.bf16.mxu0 0
        %692 = vmatpush1.bf16.msra.mxu0 %v621
        %693 = vmatprep.subr.bf16.mxu0 0
        %694 = vmatpush1.bf16.msra.mxu0 %v622
        %695 = vmatprep.subr.bf16.mxu0 0
        %696 = vmatpush1.bf16.msra.mxu0 %v623
        %697 = vmatprep.subr.bf16.mxu0 0
        %698 = vmatpush1.bf16.msra.mxu0 %v624
        %699 = vmatprep.subr.bf16.mxu0 0
        %700 = vmatpush1.bf16.msra.mxu0 %v625
        %701 = vmatprep.subr.bf16.mxu0 0
        %702 = vmatpush1.bf16.msra.mxu0 %v626
        %703 = vmatprep.subr.bf16.mxu0 0
        %704 = vmatpush1.bf16.msra.mxu0 %v627
        %705 = vmatprep.subr.bf16.mxu0 0
        %706 = vmatpush1.bf16.msra.mxu0 %v628
        %707 = vmatprep.subr.bf16.mxu0 0
        %708 = vmatpush1.bf16.msra.mxu0 %v629
        %709 = vmatprep.subr.bf16.mxu0 0
        %710 = vmatpush1.bf16.msra.mxu0 %v630
        %711 = vmatprep.mubr.bf16.mxu0 %v480
        %712 = vmatmul.mubr.bf16.gmra.mrb[0].mxu0 %v473
        %v713 = vpop.f32.mrb[0].mxu0
        %v714 = vadd.f32 0.0, %v713
        %v715 = vpop.f32.mrb[0].mxu0
        %v716 = vpop.f32.mrb[0].mxu0
        %v717 = vpop.f32.mrb[0].mxu0
        %718 = vdwg.mxu0
        %719 = vmatprep.subr.bf16.mxu0 0
        %720 = vmatpush1.bf16.msra.mxu0 %v631
        %721 = vmatprep.subr.bf16.mxu0 0
        %722 = vmatpush1.bf16.msra.mxu0 %v632
        %723 = vmatprep.subr.bf16.mxu0 0
        %724 = vmatpush1.bf16.msra.mxu0 %v633
        %725 = vmatprep.subr.bf16.mxu0 0
        %726 = vmatpush1.bf16.msra.mxu0 %v634
        %727 = vmatprep.subr.bf16.mxu0 0
        %728 = vmatpush1.bf16.msra.mxu0 %v635
        %729 = vmatprep.subr.bf16.mxu0 0
        %730 = vmatpush1.bf16.msra.mxu0 %v636
        %731 = vmatprep.subr.bf16.mxu0 0
        %732 = vmatpush1.bf16.msra.mxu0 %v637
        %733 = vmatprep.subr.bf16.mxu0 0
        %734 = vmatpush1.bf16.msra.mxu0 %v638
        %735 = vmatprep.subr.bf16.mxu0 0
        %736 = vmatpush1.bf16.msra.mxu0 %v639
        %737 = vmatprep.subr.bf16.mxu0 0
        %738 = vmatpush1.bf16.msra.mxu0 %v640
        %739 = vmatprep.subr.bf16.mxu0 0
        %740 = vmatpush1.bf16.msra.mxu0 %v641
        %741 = vmatprep.subr.bf16.mxu0 0
        %742 = vmatpush1.bf16.msra.mxu0 %v642
        %743 = vmatprep.subr.bf16.mxu0 0
        %744 = vmatpush1.bf16.msra.mxu0 %v643
        %745 = vmatprep.subr.bf16.mxu0 0
        %746 = vmatpush1.bf16.msra.mxu0 %v644
        %747 = vmatprep.subr.bf16.mxu0 0
        %748 = vmatpush1.bf16.msra.mxu0 %v645
        %749 = vmatprep.subr.bf16.mxu0 0
        %750 = vmatpush1.bf16.msra.mxu0 %v646
        %751 = vmatprep.mubr.bf16.mxu0 %v482
        %752 = vmatmul.mubr.bf16.gmra.mrb[0].mxu0 %v481
        %v753 = vpop.f32.mrb[0].mxu0
        %v754 = vadd.f32 %v714, %v753
        %v755 = vpop.f32.mrb[0].mxu0
        %v756 = vpop.f32.mrb[0].mxu0
        %v757 = vpop.f32.mrb[0].mxu0
        %758 = vdwg.mxu0
        %v759 = vadd.f32 %v392, %v754
        %vm760 = vcmask 254976
        %761 = vst.msk [vmem:[#allocation2] sm:$0x3] %vm760, %v759
        %p762 = scmp.eq.s32.totalorder %s26, 1
        // Predicated region
        $region61: #{tpu_custom_call.1} parent=55 // pred_check
          %p763 = pneg %p762
        $region62: #{tpu_custom_call.1} parent=55 // pred_check_branch
          %765 = sbr.rel (%p763) target = $region64
        $region63: #{tpu_custom_call.1} parent=55 // pred_region
          %v766 = vld [vmem:[#allocation2] sm:$0x3]
          %v767 = vld [vmem:[%s3] sm:$0x1]
          %v769 = vlaneseq
          %v770 = vshrl.u32 %v769, 7
          %v771 = vsub.s32 0, %v770
          %v772 = vrot.slane %v767, %v771
          %v774 = vadd.f32 %v766, %v772
          %v775 = vmax.f32 %v774, 0.0
          %v776 = vpack.c.bf16 %v775, %v775
          %v777 = vld [vmem:[%s4] sm:$0xf]
          %v778 = vld [vmem:[%s4 + $0x4] sm:$0xf]
          %v779 = vld [vmem:[%s4 + $0x8] sm:$0xf]
          %v780 = vld [vmem:[%s4 + $0xc] sm:$0xf]
          %v781 = vld [vmem:[%s384] sm:$0x1]
          %v782 = vld [vmem:[%s5] sm:$0xf]
          %v783 = vld [vmem:[%s5 + $0x4] sm:$0xf]
          %v784 = vld [vmem:[%s5 + $0x8] sm:$0xf]
          %v785 = vld [vmem:[%s5 + $0xc] sm:$0xf]
          %v786 = vld [vmem:[%s5 + $0x10] sm:$0xf]
          %v787 = vld [vmem:[%s5 + $0x14] sm:$0xf]
          %v788 = vld [vmem:[%s5 + $0x18] sm:$0x1]
          %v796 = vunpack.c.l.b16 %v782
          %v797 = vunpack.c.l.b16 %v783
          %v798 = vunpack.c.l.b16 %v784
          %v799 = vunpack.c.l.b16 %v785
          %v800 = vunpack.c.l.b16 %v786
          %v801 = vunpack.c.l.b16 %v787
          %v802 = vunpack.c.l.b16 %v788
          %v803 = vpack.c.b16 %v797, %v796
          %v804 = vpack.c.b16 %v799, %v798
          %v805 = vpack.c.b16 %v801, %v800
          %v806 = vpack.c.b16 %v802, %v802
          %vm810 = vcmask 408576
          %v812 = vsel %vm810, %v781, 0
          %vm814 = vcmask 1040384
          %v816 = vsel %vm814, %v806, 0
          %818 = vmatprep.subr.bf16.mxu0 0
          %819 = vmatpush1.bf16.msra.mxu0 %v803
          %820 = vmatprep.subr.bf16.mxu0 0
          %821 = vmatpush1.bf16.msra.mxu0 %v804
          %822 = vmatprep.subr.bf16.mxu0 0
          %823 = vmatpush1.bf16.msra.mxu0 %v805
          %824 = vmatprep.subr.bf16.mxu0 0
          %825 = vmatpush1.bf16.msra.mxu0 %v816
          %826 = vmatprep.subr.bf16.mxu0 0
          %827 = vmatpush1.bf16.msra.mxu0 0
          %828 = vmatprep.subr.bf16.mxu0 0
          %829 = vmatpush1.bf16.msra.mxu0 0
          %830 = vmatprep.subr.bf16.mxu0 0
          %831 = vmatpush1.bf16.msra.mxu0 0
          %832 = vmatprep.subr.bf16.mxu0 0
          %833 = vmatpush1.bf16.msra.mxu0 0
          %834 = vmatprep.subr.bf16.mxu0 0
          %835 = vmatpush1.bf16.msra.mxu0 0
          %836 = vmatprep.subr.bf16.mxu0 0
          %837 = vmatpush1.bf16.msra.mxu0 0
          %838 = vmatprep.subr.bf16.mxu0 0
          %839 = vmatpush1.bf16.msra.mxu0 0
          %840 = vmatprep.subr.bf16.mxu0 0
          %841 = vmatpush1.bf16.msra.mxu0 0
          %842 = vmatprep.subr.bf16.mxu0 0
          %843 = vmatpush1.bf16.msra.mxu0 0
          %844 = vmatprep.subr.bf16.mxu0 0
          %845 = vmatpush1.bf16.msra.mxu0 0
          %846 = vmatprep.subr.bf16.mxu0 0
          %847 = vmatpush1.bf16.msra.mxu0 0
          %848 = vmatprep.subr.bf16.mxu0 0
          %849 = vmatpush1.bf16.msra.mxu0 0
          %850 = vmatprep.mubr.bf16.mxu0 0
          %851 = vmatmul.mubr.bf16.gmra.mrb[0].mxu0 %v812
          %v852 = vpop.f32.mrb[0].mxu0
          %v853 = vadd.f32 0.0, %v852
          %v854 = vpop.f32.mrb[0].mxu0
          %v855 = vpop.f32.mrb[0].mxu0
          %v856 = vpop.f32.mrb[0].mxu0
          %857 = vdwg.mxu0
          %v862 = vunpack.c.l.b16 %v777
          %v863 = vunpack.c.l.b16 %v778
          %v864 = vunpack.c.l.b16 %v779
          %v865 = vunpack.c.l.b16 %v780
          %v866 = vpack.c.b16 %v863, %v862
          %v867 = vpack.c.b16 %v865, %v864
          %vm870 = vcmask 261120
          %v872 = vsel %vm870, %v776, 0
          %874 = vmatprep.subr.bf16.mxu0 0
          %875 = vmatpush1.bf16.msra.mxu0 %v866
          %876 = vmatprep.subr.bf16.mxu0 0
          %877 = vmatpush1.bf16.msra.mxu0 %v867
          %878 = vmatprep.subr.bf16.mxu0 0
          %879 = vmatpush1.bf16.msra.mxu0 0
          %880 = vmatprep.subr.bf16.mxu0 0
          %881 = vmatpush1.bf16.msra.mxu0 0
          %882 = vmatprep.subr.bf16.mxu0 0
          %883 = vmatpush1.bf16.msra.mxu0 0
          %884 = vmatprep.subr.bf16.mxu0 0
          %885 = vmatpush1.bf16.msra.mxu0 0
          %886 = vmatprep.subr.bf16.mxu0 0
          %887 = vmatpush1.bf16.msra.mxu0 0
          %888 = vmatprep.subr.bf16.mxu0 0
          %889 = vmatpush1.bf16.msra.mxu0 0
          %890 = vmatprep.subr.bf16.mxu0 0
          %891 = vmatpush1.bf16.msra.mxu0 0
          %892 = vmatprep.subr.bf16.mxu0 0
          %893 = vmatpush1.bf16.msra.mxu0 0
          %894 = vmatprep.subr.bf16.mxu0 0
          %895 = vmatpush1.bf16.msra.mxu0 0
          %896 = vmatprep.subr.bf16.mxu0 0
          %897 = vmatpush1.bf16.msra.mxu0 0
          %898 = vmatprep.subr.bf16.mxu0 0
          %899 = vmatpush1.bf16.msra.mxu0 0
          %900 = vmatprep.subr.bf16.mxu0 0
          %901 = vmatpush1.bf16.msra.mxu0 0
          %902 = vmatprep.subr.bf16.mxu0 0
          %903 = vmatpush1.bf16.msra.mxu0 0
          %904 = vmatprep.subr.bf16.mxu0 0
          %905 = vmatpush1.bf16.msra.mxu0 0
          %906 = vmatprep.mubr.bf16.mxu0 0
          %907 = vmatmul.mubr.bf16.gmra.mrb[0].mxu0 %v872
          %v908 = vpop.f32.mrb[0].mxu0
          %v909 = vadd.f32 %v853, %v908
          %v910 = vpop.f32.mrb[0].mxu0
          %v911 = vpop.f32.mrb[0].mxu0
          %v912 = vpop.f32.mrb[0].mxu0
          %913 = vdwg.mxu0
          %v914 = vld [vmem:[%s6] sm:$0x1]
          %v916 = vlaneseq
          %v917 = vshrl.u32 %v916, 7
          %v918 = vsub.s32 0, %v917
          %v919 = vrot.slane %v914, %v918
          %v921 = vadd.f32 %v909, %v919
          %v922 = vmax.f32 %v921, 0.0
          %v923 = vpack.c.bf16 %v922, %v922
          %v924 = vld [vmem:[%s7] sm:$0xf]
          %v925 = vld [vmem:[%s7 + $0x4] sm:$0xf]
          %v926 = vld [vmem:[%s7 + $0x8] sm:$0xf]
          %v927 = vld [vmem:[%s7 + $0xc] sm:$0xf]
          %v928 = vld [vmem:[%s8] sm:$0x1]
          %v930 = vlaneseq
          %v931 = vshrl.u32 %v930, 7
          %v932 = vsub.s32 0, %v931
          %v933 = vrot.slane %v928, %v932
          %v939 = vunpack.c.l.b16 %v924
          %v940 = vunpack.c.l.b16 %v925
          %v941 = vunpack.c.l.b16 %v926
          %v942 = vunpack.c.l.b16 %v927
          %v943 = vpack.c.b16 %v940, %v939
          %v944 = vpack.c.b16 %v942, %v941
          %v948 = vsel %vm870, %v923, 0
          %950 = vmatprep.subr.bf16.mxu0 0
          %951 = vmatpush1.bf16.msra.mxu0 %v943
          %952 = vmatprep.subr.bf16.mxu0 0
          %953 = vmatpush1.bf16.msra.mxu0 %v944
          %954 = vmatprep.subr.bf16.mxu0 0
          %955 = vmatpush1.bf16.msra.mxu0 0
          %956 = vmatprep.subr.bf16.mxu0 0
          %957 = vmatpush1.bf16.msra.mxu0 0
          %958 = vmatprep.subr.bf16.mxu0 0
          %959 = vmatpush1.bf16.msra.mxu0 0
          %960 = vmatprep.subr.bf16.mxu0 0
          %961 = vmatpush1.bf16.msra.mxu0 0
          %962 = vmatprep.subr.bf16.mxu0 0
          %963 = vmatpush1.bf16.msra.mxu0 0
          %964 = vmatprep.subr.bf16.mxu0 0
          %965 = vmatpush1.bf16.msra.mxu0 0
          %966 = vmatprep.subr.bf16.mxu0 0
          %967 = vmatpush1.bf16.msra.mxu0 0
          %968 = vmatprep.subr.bf16.mxu0 0
          %969 = vmatpush1.bf16.msra.mxu0 0
          %970 = vmatprep.subr.bf16.mxu0 0
          %971 = vmatpush1.bf16.msra.mxu0 0
          %972 = vmatprep.subr.bf16.mxu0 0
          %973 = vmatpush1.bf16.msra.mxu0 0
          %974 = vmatprep.subr.bf16.mxu0 0
          %975 = vmatpush1.bf16.msra.mxu0 0
          %976 = vmatprep.subr.bf16.mxu0 0
          %977 = vmatpush1.bf16.msra.mxu0 0
          %978 = vmatprep.subr.bf16.mxu0 0
          %979 = vmatpush1.bf16.msra.mxu0 0
          %980 = vmatprep.subr.bf16.mxu0 0
          %981 = vmatpush1.bf16.msra.mxu0 0
          %982 = vmatprep.mubr.bf16.mxu0 0
          %983 = vmatmul.mubr.bf16.gmra.mrb[0].mxu0 %v948
          %v984 = vpop.f32.mrb[0].mxu0
          %v985 = vadd.f32 %v933, %v984
          %v986 = vpop.f32.mrb[0].mxu0
          %v987 = vpop.f32.mrb[0].mxu0
          %v988 = vpop.f32.mrb[0].mxu0
          %989 = vdwg.mxu0
          %v990 = vmax.f32 %v985, 0.0
          %991 = vst.msk [vmem:[#allocation3] sm:$0x3] %vm760, %v990
        $region64: #{tpu_custom_call.1} parent=55 // pred_fallthru
          _
        // Predicated region
        $region65: #{tpu_custom_call.1} parent=55 // pred_check
          %p992 = pneg %p257
        $region66: #{tpu_custom_call.1} parent=55 // pred_check_branch
          %994 = sbr.rel (%p992) target = $region68
        $region67: #{tpu_custom_call.1} parent=55 // pred_region
          %s996 = ssub.s32 32, 32
          %997 = vsyncadd [#allocation4], %s996
          %s998 = smul.addr %s25, 32
          %s999 = scalar_lea.hbm %s9, %s998
          %s1001 = sshll.u32 [#allocation3], 4
          %s1002 = int_to_ptr.vmem [resolvable:$true] %s1001
          %1004 = dma.vmem_to_hbm [thread:$0]  %s1002, 32, %s999, [#allocation4]
        $region68: #{tpu_custom_call.1} parent=55 // pred_fallthru
          _
        // Predicated region
        $region69: #{tpu_custom_call.1} parent=55 // pred_check
          %p1005 = pneg %p257
        $region70: #{tpu_custom_call.1} parent=55 // pred_check_branch
          %1007 = sbr.rel (%p1005) target = $region72
        $region71: #{tpu_custom_call.1} parent=55 // pred_region
          %1008 = dma.done [#allocation4], 32
        $region72: #{tpu_custom_call.1} parent=55 // pred_fallthru
          _
      $region56: #{tpu_custom_call.1} parent=5 // pred_fallthru
        _
      %p1009 = scmp.le.s32.totalorder 2, %s16
      // Predicated region
      $region73: #{tpu_custom_call.1} parent=5 // pred_check
        %p1010 = pneg %p1009
      $region74: #{tpu_custom_call.1} parent=5 // pred_check_branch
        %1012 = sbr.rel (%p1010) target = $region76
      $region75: #{tpu_custom_call.1} parent=5 // pred_region
        %s1013 = ssub.s32 %s16, 2
      $region76: #{tpu_custom_call.1} parent=5 // pred_fallthru
        _
    $region6: #{tpu_custom_call.1} parent=1 // loop_footer
      %s20 = sadd.s32 1, %s16
    $region7: #{tpu_custom_call.1} parent=1 // loop_footer_branch
      %15 = sbr.rel target = $region3
    $region8: #{tpu_custom_call.1} parent=1 // loop_exit
      _
    %1014 = vsyncpa [#allocation4], 1
    %s1015 = scalar_lea.sflag [#allocation4], 1
    %1016 = vsyncpa %s1015, 1

</llo_original>
